<compile_context>
chip_gen: v5e
topology: v5e:2x2
jax: 0.10.0
libtpu: 0.0.40
codegen_flags: <defaults>
</compile_context>

<pallas_src>
import jax
import jax.numpy as jnp
from jax.experimental import pallas as pl
from jax.experimental.pallas import tpu as pltpu

LN_EPS = 1e-5   # torch.nn.LayerNorm default
G = 8           # rows packed per vreg row (G * latent_dim = 128 lanes for the output)


def _round_up(n, m):
    return ((n + m - 1) // m) * m


def _block_diag(w, g):
    """(din, dout) -> (g*din, g*dout) block-diagonal matrix with g copies of w."""
    din, dout = w.shape
    eye = jnp.eye(g, dtype=w.dtype)
    return (eye[:, None, :, None] * w[None, :, None, :]).reshape(g * din, g * dout)


def _encoder_kernel(x_ref, w1_ref, b1_ref, sm1_ref, w2_ref, b2_ref, sm2_ref,
                    wo_ref, bo_ref, out_ref):
    """Row-packed fused encoder.

    x_ref  : (tm_p, G*F)   G original rows lane-concatenated per packed row
    w*_ref : block-diagonal transposed weights (G replicated blocks); b*: G-tiled biases
    sm*_ref: block-diagonal ones/width matrices -> segmented mean via MXU matmul
    out_ref: (tm_p, G*L)   packed output (row-major identical to (tm_p*G, L))
    """
    cdt = w1_ref.dtype  # streamed-operand dtype (f32 or bf16); accumulation stays f32

    def seg_layernorm_relu(h, sm):
        # per-32-lane-group LayerNorm (no affine); reductions offloaded to the MXU
        mean = jnp.dot(h, sm, preferred_element_type=jnp.float32)
        c = h - mean
        var = jnp.dot(c * c, sm, preferred_element_type=jnp.float32)
        return jnp.maximum(c * jax.lax.rsqrt(var + LN_EPS), 0.0)

    # layer 0: CondLayer (conditions, if any, are pre-folded into W1 by the wrapper)
    h = jnp.dot(x_ref[...], w1_ref[...], preferred_element_type=jnp.float32) + b1_ref[...]
    h = seg_layernorm_relu(h, sm1_ref[...])

    # hidden layer 1
    h = jnp.dot(h.astype(cdt), w2_ref[...], preferred_element_type=jnp.float32) + b2_ref[...]
    h = seg_layernorm_relu(h, sm2_ref[...])

    # output projection (lane-dense 128-wide store)
    out = jnp.dot(h.astype(cdt), wo_ref[...], preferred_element_type=jnp.float32) + bo_ref[...]
    out_ref[...] = out.astype(out_ref.dtype)


def _default_min_steps():
    # v7x has 2 TensorCores/chip -> keep >=2 grid steps for megacore sharding;
    # v5e/v6e run the grid serially on one core, so a 1-step grid is optimal there.
    try:
        if "v7" in jax.devices()[0].device_kind.lower():
            return 2
    except Exception:
        pass
    return 1


def encoder_forward(x, params, *, tm=8192, compute_dtype=jnp.float32, min_steps=None):
    """x: [B, S, F].  params: dict of transposed weights (in, out) and biases (out,)."""
    B, S, F = x.shape
    w1, b1 = params["w1"], params["b1"]
    w2, b2 = params["w2"], params["b2"]
    wo, bo = params["wo"], params["bo"]
    H1, H2, L = w1.shape[1], w2.shape[1], wo.shape[1]
    out_dtype = x.dtype

    # packed lane widths must be multiples of 128 (holds for F=H=32, L=16 -> 256/256/128)
    for d in (F, H1, H2, L):
        assert (G * d) % 128 == 0, "packed feature width must be a multiple of 128"

    rows = B * S
    rows_g = _round_up(rows, G)
    x2d = x.reshape(rows, F)
    if rows_g != rows:
        x2d = jnp.pad(x2d, ((0, rows_g - rows), (0, 0)))   # padded rows sliced off below
    prows = rows_g // G
    x_packed = x2d.reshape(prows, G * F).astype(compute_dtype)   # row-major repack (free)

    # Tile selection (packed rows): as large as useful, no forced multi-step grid.
    if min_steps is None:
        min_steps = _default_min_steps()
    tm_p = max(8, _round_up(tm // G, 8))
    tm_p = min(tm_p, 4096)                          # VMEM headroom cap (~15 MiB worst case)
    tm_p = min(tm_p, _round_up(prows, 8))           # never larger than the (padded) problem
    if min_steps > 1 and prows >= min_steps * 8:
        tm_p = max(8, min(tm_p, _round_up(pl.cdiv(prows, min_steps), 8)))
    grid = pl.cdiv(prows, tm_p)
    prows_pad = grid * tm_p
    if prows_pad != prows:
        x_packed = jnp.pad(x_packed, ((0, prows_pad - prows), (0, 0)))

    # Block-diagonal weights (G replicated blocks) + G-tiled biases; LN ones-matrices in f32.
    w1_bd = _block_diag(w1, G).astype(compute_dtype)
    w2_bd = _block_diag(w2, G).astype(compute_dtype)
    wo_bd = _block_diag(wo, G).astype(compute_dtype)
    b1_t = jnp.tile(b1.astype(jnp.float32), G).reshape(1, -1)
    b2_t = jnp.tile(b2.astype(jnp.float32), G).reshape(1, -1)
    bo_t = jnp.tile(bo.astype(jnp.float32), G).reshape(1, -1)
    sm1 = _block_diag(jnp.full((H1, H1), 1.0 / H1, jnp.float32), G)
    sm2 = _block_diag(jnp.full((H2, H2), 1.0 / H2, jnp.float32), G)

    const = lambda i: (0, 0)   # constant block index -> DMA'd once, stays VMEM-resident
    out_packed = pl.pallas_call(
        _encoder_kernel,
        out_shape=jax.ShapeDtypeStruct((prows_pad, G * L), out_dtype),
        grid_spec=pltpu.PrefetchScalarGridSpec(
            num_scalar_prefetch=0,
            grid=(grid,),
            in_specs=[
                pl.BlockSpec((tm_p, G * F), lambda i: (i, 0)),   # packed x row tile
                pl.BlockSpec((G * F, G * H1), const),            # W1 block-diag
                pl.BlockSpec((1, G * H1), const),                # b1 tiled
                pl.BlockSpec((G * H1, G * H1), const),           # LN1 ones/H1 block-diag
                pl.BlockSpec((G * H1, G * H2), const),           # W2 block-diag
                pl.BlockSpec((1, G * H2), const),                # b2 tiled
                pl.BlockSpec((G * H2, G * H2), const),           # LN2 ones/H2 block-diag
                pl.BlockSpec((G * H2, G * L), const),            # Wo block-diag
                pl.BlockSpec((1, G * L), const),                 # bo tiled
            ],
            out_specs=pl.BlockSpec((tm_p, G * L), lambda i: (i, 0)),
        ),
        compiler_params=pltpu.CompilerParams(
            dimension_semantics=("parallel",)),
    )(x_packed, w1_bd, b1_t, sm1, w2_bd, b2_t, sm2, wo_bd, bo_t)

    out = out_packed[:prows].reshape(rows_g, L)[:rows]   # bit-exact row-major unpack
    return out.reshape(B, S, L)


# ----------------------------- parameters & pure-JAX reference -----------------------------

def _init_linear(key, in_features, out_features, bias=True):
    # PyTorch nn.Linear default init: U(-1/sqrt(in), 1/sqrt(in)) for W and b.
    kw, kb = jax.random.split(key)
    bound = 1.0 / (in_features ** 0.5)
    w = jax.random.uniform(kw, (out_features, in_features), jnp.float32, -bound, bound)
    b = jax.random.uniform(kb, (out_features,), jnp.float32, -bound, bound) if bias else None
    return w, b


def _make_params(key, feat, h1, h2, latent, n_conditions=0):
    """feat = total input width to the first CondLayer, incl. trailing condition one-hots."""
    k1, kc, k2, k3 = jax.random.split(key, 4)
    w_main, b1 = _init_linear(k1, feat - n_conditions, h1)
    params = {"b1": b1}
    if n_conditions > 0:
        w_cond, _ = _init_linear(kc, n_conditions, h1, bias=False)   # cond_layer: bias=False
        # CondLayer: layer(x_main) + cond_layer(cond) == x_full @ [W_main^T ; W_cond^T] + b1
        params["w1"] = jnp.concatenate([w_main.T, w_cond.T], axis=0)
        params["w1_main"], params["w1_cond"] = w_main.T, w_cond.T
    else:
        params["w1"] = w_main.T
    w2, b2 = _init_linear(k2, h1, h2)
    wo, bo = _init_linear(k3, h2, latent)
    params.update({"w2": w2.T, "b2": b2, "wo": wo.T, "bo": bo})
    return params


def _layernorm_ref(h):
    mean = jnp.mean(h, axis=-1, keepdims=True)
    var = jnp.mean((h - mean) ** 2, axis=-1, keepdims=True)
    return (h - mean) * jax.lax.rsqrt(var + LN_EPS)


def _reference(x, params, n_conditions=0):
    if n_conditions > 0:
        xm, cond = x[..., :-n_conditions], x[..., -n_conditions:]
        h = xm @ params["w1_main"] + cond @ params["w1_cond"] + params["b1"]
    else:
        h = x @ params["w1"] + params["b1"]
    h = jnp.maximum(_layernorm_ref(h), 0.0)
    h = h @ params["w2"] + params["b2"]
    h = jnp.maximum(_layernorm_ref(h), 0.0)
    return h @ params["wo"] + params["bo"]


if __name__ == "__main__":
    layer_dims = [32, 32, 32]     # [in_features, hidden1, hidden2]
    latent_dim = 16
    F, H1, H2 = layer_dims

    key = jax.random.PRNGKey(0)
    kx, kx2, kx3, kp, kpc = jax.random.split(key, 5)

    # --- test 1: vanilla path (n_conditions=0), exact f32 check ---------------------------
    params = _make_params(kp, F, H1, H2, latent_dim)
    B, S = 2, 8
    x = jax.random.normal(kx, (B, S, F), jnp.float32)
    out = jax.block_until_ready(encoder_forward(x, params))
    ref = _reference(x, params)
    assert out.shape == (B, S, latent_dim)
    assert jnp.allclose(out, ref, atol=1e-5, rtol=1e-5), "f32 mismatch vs pure-JAX reference"

    # --- test 2: ragged row count (padding + packed-row grid) -----------------------------
    B2, S2 = 3, 37   # 111 rows -> padded to a multiple of G and of the packed tile
    x2 = jax.random.normal(kx2, (B2, S2, F), jnp.float32)
    out2 = jax.block_until_ready(encoder_forward(x2, params))
    ref2 = _reference(x2, params)
    assert out2.shape == (B2, S2, latent_dim)
    assert jnp.allclose(out2, ref2, atol=1e-5, rtol=1e-5), "padded-path mismatch vs reference"

    # --- test 3: conditional path (n_conditions>0, folded into W1 in the wrapper) ---------
    n_cond = 4
    params_c = _make_params(kpc, F, H1, H2, latent_dim, n_conditions=n_cond)
    x3m = jax.random.normal(kx3, (B, S, F - n_cond), jnp.float32)
    onehot = jax.nn.one_hot(jnp.arange(B * S) % n_cond, n_cond).reshape(B, S, n_cond)
    x3 = jnp.concatenate([x3m, onehot], axis=-1)
    out3 = jax.block_until_ready(encoder_forward(x3, params_c))
    ref3 = _reference(x3, params_c, n_conditions=n_cond)
    assert jnp.allclose(out3, ref3, atol=1e-5, rtol=1e-5), "conditional path mismatch"

    # --- test 4: bf16 streaming of x / weights (bandwidth option), loose check ------------
    out_bf16 = jax.block_until_ready(
        encoder_forward(x, params, compute_dtype=jnp.bfloat16))
    assert out_bf16.shape == (B, S, latent_dim)
    assert float(jnp.max(jnp.abs(out_bf16.astype(jnp.float32) - ref))) < 0.1, \
        "bf16 path diverged from f32 reference"

    # TODO(synk): optional BatchNorm / Dropout branches of the module (off by default) are
    # not implemented.
    print("KERNEL_OK")
</pallas_src>

<mosaic_0001>
module attributes {stable_mosaic.version = 11 : i64} {
  func.func @_encoder_kernel(%arg0: i32, %arg1: memref<8x256xf32, #tpu.memory_space<vmem>>, %arg2: memref<256x256xf32, #tpu.memory_space<vmem>>, %arg3: memref<1x256xf32, #tpu.memory_space<vmem>>, %arg4: memref<256x256xf32, #tpu.memory_space<vmem>>, %arg5: memref<256x256xf32, #tpu.memory_space<vmem>>, %arg6: memref<1x256xf32, #tpu.memory_space<vmem>>, %arg7: memref<256x256xf32, #tpu.memory_space<vmem>>, %arg8: memref<256x128xf32, #tpu.memory_space<vmem>>, %arg9: memref<1x128xf32, #tpu.memory_space<vmem>>, %arg10: memref<8x128xf32, #tpu.memory_space<vmem>>) attributes {dimension_semantics = [#tpu.dimension_semantics<parallel>], iteration_bounds = array<i64: 1>, scalar_prefetch = 0 : i64, scratch_operands = 0 : i64, tpu.core_type = #tpu.core_type<tc>, window_params = [{transform_indices = @transform_0, window_bounds = array<i64: 8, 256>}, {pipeline_mode = #tpu.pipeline_mode<synchronous>, transform_indices = @transform_1, window_bounds = array<i64: 256, 256>}, {pipeline_mode = #tpu.pipeline_mode<synchronous>, transform_indices = @transform_2, window_bounds = array<i64: 1, 256>}, {pipeline_mode = #tpu.pipeline_mode<synchronous>, transform_indices = @transform_3, window_bounds = array<i64: 256, 256>}, {pipeline_mode = #tpu.pipeline_mode<synchronous>, transform_indices = @transform_4, window_bounds = array<i64: 256, 256>}, {pipeline_mode = #tpu.pipeline_mode<synchronous>, transform_indices = @transform_5, window_bounds = array<i64: 1, 256>}, {pipeline_mode = #tpu.pipeline_mode<synchronous>, transform_indices = @transform_6, window_bounds = array<i64: 256, 256>}, {pipeline_mode = #tpu.pipeline_mode<synchronous>, transform_indices = @transform_7, window_bounds = array<i64: 256, 128>}, {pipeline_mode = #tpu.pipeline_mode<synchronous>, transform_indices = @transform_8, window_bounds = array<i64: 1, 128>}, {transform_indices = @transform_9, window_bounds = array<i64: 8, 128>}]} {
    %c0 = arith.constant 0 : index
    %c0_0 = arith.constant 0 : index
    %0 = vector.load %arg1[%c0, %c0_0] : memref<8x256xf32, #tpu.memory_space<vmem>>, vector<8x256xf32>
    %c0_1 = arith.constant 0 : index
    %c0_2 = arith.constant 0 : index
    %1 = vector.load %arg2[%c0_1, %c0_2] : memref<256x256xf32, #tpu.memory_space<vmem>>, vector<256x256xf32>
    %cst = arith.constant dense<0.000000e+00> : vector<8x256xf32>
    %2 = tpu.matmul %0, %1, %cst {dimension_numbers = #tpu.dot_dimension_numbers<[1], [0], [0], [1], [0, 0, 1, 1], [], []>} : vector<8x256xf32>, vector<256x256xf32>, vector<8x256xf32> -> vector<8x256xf32>
    %c0_3 = arith.constant 0 : index
    %c0_4 = arith.constant 0 : index
    %3 = vector.load %arg3[%c0_3, %c0_4] : memref<1x256xf32, #tpu.memory_space<vmem>>, vector<1x256xf32>
    %4 = vector.broadcast %3 : vector<1x256xf32> to vector<8x256xf32>
    %5 = arith.addf %2, %4 : vector<8x256xf32>
    %c0_5 = arith.constant 0 : index
    %c0_6 = arith.constant 0 : index
    %6 = vector.load %arg4[%c0_5, %c0_6] : memref<256x256xf32, #tpu.memory_space<vmem>>, vector<256x256xf32>
    %cst_7 = arith.constant dense<0.000000e+00> : vector<8x256xf32>
    %7 = tpu.matmul %5, %6, %cst_7 {dimension_numbers = #tpu.dot_dimension_numbers<[1], [0], [0], [1], [0, 0, 1, 1], [], []>} : vector<8x256xf32>, vector<256x256xf32>, vector<8x256xf32> -> vector<8x256xf32>
    %8 = arith.subf %5, %7 : vector<8x256xf32>
    %9 = arith.mulf %8, %8 : vector<8x256xf32>
    %cst_8 = arith.constant dense<0.000000e+00> : vector<8x256xf32>
    %10 = tpu.matmul %9, %6, %cst_8 {dimension_numbers = #tpu.dot_dimension_numbers<[1], [0], [0], [1], [0, 0, 1, 1], [], []>} : vector<8x256xf32>, vector<256x256xf32>, vector<8x256xf32> -> vector<8x256xf32>
    %cst_9 = arith.constant 9.99999974E-6 : f32
    %11 = vector.broadcast %cst_9 : f32 to vector<8x256xf32>
    %12 = arith.addf %10, %11 : vector<8x256xf32>
    %13 = math.rsqrt %12 : vector<8x256xf32>
    %14 = arith.mulf %8, %13 : vector<8x256xf32>
    %cst_10 = arith.constant 0.000000e+00 : f32
    %15 = vector.broadcast %cst_10 : f32 to vector<8x256xf32>
    %16 = arith.maximumf %14, %15 : vector<8x256xf32>
    %c0_11 = arith.constant 0 : index
    %c0_12 = arith.constant 0 : index
    %17 = vector.load %arg5[%c0_11, %c0_12] : memref<256x256xf32, #tpu.memory_space<vmem>>, vector<256x256xf32>
    %cst_13 = arith.constant dense<0.000000e+00> : vector<8x256xf32>
    %18 = tpu.matmul %16, %17, %cst_13 {dimension_numbers = #tpu.dot_dimension_numbers<[1], [0], [0], [1], [0, 0, 1, 1], [], []>} : vector<8x256xf32>, vector<256x256xf32>, vector<8x256xf32> -> vector<8x256xf32>
    %c0_14 = arith.constant 0 : index
    %c0_15 = arith.constant 0 : index
    %19 = vector.load %arg6[%c0_14, %c0_15] : memref<1x256xf32, #tpu.memory_space<vmem>>, vector<1x256xf32>
    %20 = vector.broadcast %19 : vector<1x256xf32> to vector<8x256xf32>
    %21 = arith.addf %18, %20 : vector<8x256xf32>
    %c0_16 = arith.constant 0 : index
    %c0_17 = arith.constant 0 : index
    %22 = vector.load %arg7[%c0_16, %c0_17] : memref<256x256xf32, #tpu.memory_space<vmem>>, vector<256x256xf32>
    %cst_18 = arith.constant dense<0.000000e+00> : vector<8x256xf32>
    %23 = tpu.matmul %21, %22, %cst_18 {dimension_numbers = #tpu.dot_dimension_numbers<[1], [0], [0], [1], [0, 0, 1, 1], [], []>} : vector<8x256xf32>, vector<256x256xf32>, vector<8x256xf32> -> vector<8x256xf32>
    %24 = arith.subf %21, %23 : vector<8x256xf32>
    %25 = arith.mulf %24, %24 : vector<8x256xf32>
    %cst_19 = arith.constant dense<0.000000e+00> : vector<8x256xf32>
    %26 = tpu.matmul %25, %22, %cst_19 {dimension_numbers = #tpu.dot_dimension_numbers<[1], [0], [0], [1], [0, 0, 1, 1], [], []>} : vector<8x256xf32>, vector<256x256xf32>, vector<8x256xf32> -> vector<8x256xf32>
    %cst_20 = arith.constant 9.99999974E-6 : f32
    %27 = vector.broadcast %cst_20 : f32 to vector<8x256xf32>
    %28 = arith.addf %26, %27 : vector<8x256xf32>
    %29 = math.rsqrt %28 : vector<8x256xf32>
    %30 = arith.mulf %24, %29 : vector<8x256xf32>
    %cst_21 = arith.constant 0.000000e+00 : f32
    %31 = vector.broadcast %cst_21 : f32 to vector<8x256xf32>
    %32 = arith.maximumf %30, %31 : vector<8x256xf32>
    %c0_22 = arith.constant 0 : index
    %c0_23 = arith.constant 0 : index
    %33 = vector.load %arg8[%c0_22, %c0_23] : memref<256x128xf32, #tpu.memory_space<vmem>>, vector<256x128xf32>
    %cst_24 = arith.constant dense<0.000000e+00> : vector<8x128xf32>
    %34 = tpu.matmul %32, %33, %cst_24 {dimension_numbers = #tpu.dot_dimension_numbers<[1], [0], [0], [1], [0, 0, 1, 1], [], []>} : vector<8x256xf32>, vector<256x128xf32>, vector<8x128xf32> -> vector<8x128xf32>
    %c0_25 = arith.constant 0 : index
    %c0_26 = arith.constant 0 : index
    %35 = vector.load %arg9[%c0_25, %c0_26] : memref<1x128xf32, #tpu.memory_space<vmem>>, vector<1x128xf32>
    %36 = vector.broadcast %35 : vector<1x128xf32> to vector<8x128xf32>
    %37 = arith.addf %34, %36 : vector<8x128xf32>
    %c0_27 = arith.constant 0 : index
    %c0_28 = arith.constant 0 : index
    %38 = vector.load %arg10[%c0_27, %c0_28] : memref<8x128xf32, #tpu.memory_space<vmem>>, vector<8x128xf32>
    tpu.vector_store %arg10[%c0_27, %c0_28], %37 {strides = array<i32>} : memref<8x128xf32, #tpu.memory_space<vmem>>, vector<8x128xf32>,
    return
  }
  func.func @transform_0(%arg0: i32) -> (i32, i32) {
    %c0_i32 = arith.constant 0 : i32
    %c0_i32_0 = arith.constant 0 : i32
    return %arg0, %c0_i32 : i32, i32
  }
  func.func @transform_1(%arg0: i32) -> (i32, i32) {
    %c0_i32 = arith.constant 0 : i32
    %c0_i32_0 = arith.constant 0 : i32
    %c0_i32_1 = arith.constant 0 : i32
    return %c0_i32, %c0_i32_0 : i32, i32
  }
  func.func @transform_2(%arg0: i32) -> (i32, i32) {
    %c0_i32 = arith.constant 0 : i32
    %c0_i32_0 = arith.constant 0 : i32
    %c0_i32_1 = arith.constant 0 : i32
    return %c0_i32, %c0_i32_0 : i32, i32
  }
  func.func @transform_3(%arg0: i32) -> (i32, i32) {
    %c0_i32 = arith.constant 0 : i32
    %c0_i32_0 = arith.constant 0 : i32
    %c0_i32_1 = arith.constant 0 : i32
    return %c0_i32, %c0_i32_0 : i32, i32
  }
  func.func @transform_4(%arg0: i32) -> (i32, i32) {
    %c0_i32 = arith.constant 0 : i32
    %c0_i32_0 = arith.constant 0 : i32
    %c0_i32_1 = arith.constant 0 : i32
    return %c0_i32, %c0_i32_0 : i32, i32
  }
  func.func @transform_5(%arg0: i32) -> (i32, i32) {
    %c0_i32 = arith.constant 0 : i32
    %c0_i32_0 = arith.constant 0 : i32
    %c0_i32_1 = arith.constant 0 : i32
    return %c0_i32, %c0_i32_0 : i32, i32
  }
  func.func @transform_6(%arg0: i32) -> (i32, i32) {
    %c0_i32 = arith.constant 0 : i32
    %c0_i32_0 = arith.constant 0 : i32
    %c0_i32_1 = arith.constant 0 : i32
    return %c0_i32, %c0_i32_0 : i32, i32
  }
  func.func @transform_7(%arg0: i32) -> (i32, i32) {
    %c0_i32 = arith.constant 0 : i32
    %c0_i32_0 = arith.constant 0 : i32
    %c0_i32_1 = arith.constant 0 : i32
    return %c0_i32, %c0_i32_0 : i32, i32
  }
  func.func @transform_8(%arg0: i32) -> (i32, i32) {
    %c0_i32 = arith.constant 0 : i32
    %c0_i32_0 = arith.constant 0 : i32
    %c0_i32_1 = arith.constant 0 : i32
    return %c0_i32, %c0_i32_0 : i32, i32
  }
  func.func @transform_9(%arg0: i32) -> (i32, i32) {
    %c0_i32 = arith.constant 0 : i32
    %c0_i32_0 = arith.constant 0 : i32
    return %arg0, %c0_i32 : i32, i32
  }
}

</mosaic_0001>

<llo_original>
// kernel: tpu_custom_call.1
$region0: #{tpu_custom_call.1}
  #allocation0 [shape = 'u32[]', space=smem, size = 0x4, offset = 0x4, fixed_abs, tag = 'smem constant byte address 0x4 - core index']
  #allocation1 [shape = 'u32[72,128]{1,0:T(1,128)}', space=vmem, size = 0x9000, scoped, tag = 'internal scratch']
  %s0 = inlined_call_operand.hbm [shape: f32[8,256], index: 0, kind: input, shape index: {}]
  %s1 = inlined_call_operand.hbm [shape: f32[256,256], index: 1, kind: input, shape index: {}]
  %s2 = inlined_call_operand.hbm [shape: f32[1,256], index: 2, kind: input, shape index: {}]
  %s3 = inlined_call_operand.hbm [shape: f32[256,256], index: 3, kind: input, shape index: {}]
  %s4 = inlined_call_operand.hbm [shape: f32[256,256], index: 4, kind: input, shape index: {}]
  %s5 = inlined_call_operand.vmem [shape: f32[1,256], index: 5, kind: input, shape index: {}]
  %s6 = inlined_call_operand.hbm [shape: f32[256,256], index: 6, kind: input, shape index: {}]
  %s7 = inlined_call_operand.hbm [shape: f32[256,128], index: 7, kind: input, shape index: {}]
  %s8 = inlined_call_operand.vmem [shape: f32[1,128], index: 8, kind: input, shape index: {}]
  %s9 = inlined_call_operand.hbm [shape: f32[8,128], index: 9, kind: output, shape index: {}]
  %s10 = sld [smem:[#allocation0]]
  $region74: #{tpu_custom_call.1} parent=0
    _
  %s12 = ssub.s32 1, %s10
  %s13 = scalar_select 0, %s12, %s10
  $region1: #{tpu_custom_call.1} parent=0
    #allocation2 [shape = 'u8[8192]{0}', space=vmem, size = 0x2000, scoped, tag = 'input window, operand 0, single buffered']
    #allocation3 [shape = 's32[1]{0}', space=sflag, size = 0x4, scoped, tag = 'scoped memory for tpu_custom_call.1']
    #allocation4 [shape = 's32[1]{0}', space=sflag, size = 0x4, scoped, tag = 'scoped memory for tpu_custom_call.1']
    #allocation5 [shape = 'u8[262144]{0}', space=vmem, size = 0x40000, scoped, tag = 'input window, operand 1, single buffered']
    #allocation6 [shape = 's32[1]{0}', space=sflag, size = 0x4, scoped, tag = 'scoped memory for tpu_custom_call.1']
    #allocation7 [shape = 'u8[1024]{0}', space=vmem, size = 0x400, scoped, tag = 'input window, operand 2, single buffered']
    #allocation8 [shape = 'u8[262144]{0}', space=vmem, size = 0x40000, scoped, tag = 'input window, operand 3, single buffered']
    #allocation9 [shape = 's32[1]{0}', space=sflag, size = 0x4, scoped, tag = 'scoped memory for tpu_custom_call.1']
    #allocation10 [shape = 'u8[262144]{0}', space=vmem, size = 0x40000, scoped, tag = 'input window, operand 4, single buffered']
    #allocation11 [shape = 'u8[262144]{0}', space=vmem, size = 0x40000, scoped, tag = 'input window, operand 6, single buffered']
    #allocation12 [shape = 's32[1]{0}', space=sflag, size = 0x4, scoped, tag = 'scoped memory for tpu_custom_call.1']
    #allocation13 [shape = 'u8[131072]{0}', space=vmem, size = 0x20000, scoped, tag = 'input window, operand 7, single buffered']
    #allocation14 [shape = 'u8[4096]{0}', space=vmem, size = 0x1000, scoped, tag = 'output window, operand 0, single buffered']
    %14 = vsyncpa [#allocation3], 0
    %15 = vsyncpa [#allocation6], 0
    %16 = vsyncpa [#allocation9], 0
    %17 = vsyncpa [#allocation12], 0
    %18 = vsyncpa [#allocation4], 0
    // Predicated region
    $region2: #{tpu_custom_call.1} parent=1 // pred_check
      _
    $region3: #{tpu_custom_call.1} parent=1 // pred_check_branch
      %20 = sbr.rel (0) target = $region5
    $region4: #{tpu_custom_call.1} parent=1 // pred_region
      %22 = vsyncadd [#allocation3], 0
      %s24 = sshll.u32 %s0, 4
      %s25 = int_to_ptr.hbm [resolvable:$true] %s24
      %s26 = sshll.u32 [#allocation2], 4
      %s27 = int_to_ptr.vmem [resolvable:$true] %s26
      %29 = dma.hbm_to_vmem [thread:$0]  %s25, 256, %s27, [#allocation3]
    $region5: #{tpu_custom_call.1} parent=1 // pred_fallthru
      _
    // Predicated region
    $region6: #{tpu_custom_call.1} parent=1 // pred_check
      _
    $region7: #{tpu_custom_call.1} parent=1 // pred_check_branch
      %31 = sbr.rel (0) target = $region9
    $region8: #{tpu_custom_call.1} parent=1 // pred_region
      %33 = vsyncadd [#allocation6], 0
      %s34 = sshll.u32 %s1, 4
      %s35 = int_to_ptr.hbm [resolvable:$true] %s34
      %s36 = sshll.u32 [#allocation5], 4
      %s37 = int_to_ptr.vmem [resolvable:$true] %s36
      %42 = dma.hbm_to_vmem [thread:$0]  %s35, 8192, %s37, [#allocation6], 256, 256, 16
    $region9: #{tpu_custom_call.1} parent=1 // pred_fallthru
      _
    // Predicated region
    $region10: #{tpu_custom_call.1} parent=1 // pred_check
      _
    $region11: #{tpu_custom_call.1} parent=1 // pred_check_branch
      %44 = sbr.rel (0) target = $region13
    $region12: #{tpu_custom_call.1} parent=1 // pred_region
      %46 = vsyncadd [#allocation6], 0
      %s48 = sshll.u32 %s2, 4
      %s49 = int_to_ptr.hbm [resolvable:$true] %s48
      %s50 = sshll.u32 [#allocation7], 4
      %s51 = int_to_ptr.vmem [resolvable:$true] %s50
      %53 = dma.hbm_to_vmem [thread:$0]  %s49, 32, %s51, [#allocation6]
    $region13: #{tpu_custom_call.1} parent=1 // pred_fallthru
      _
    // Predicated region
    $region14: #{tpu_custom_call.1} parent=1 // pred_check
      _
    $region15: #{tpu_custom_call.1} parent=1 // pred_check_branch
      %55 = sbr.rel (0) target = $region17
    $region16: #{tpu_custom_call.1} parent=1 // pred_region
      %57 = vsyncadd [#allocation9], 0
      %s58 = sshll.u32 %s3, 4
      %s59 = int_to_ptr.hbm [resolvable:$true] %s58
      %s60 = sshll.u32 [#allocation8], 4
      %s61 = int_to_ptr.vmem [resolvable:$true] %s60
      %66 = dma.hbm_to_vmem [thread:$0]  %s59, 8192, %s61, [#allocation9], 256, 256, 16
    $region17: #{tpu_custom_call.1} parent=1 // pred_fallthru
      _
    // Predicated region
    $region18: #{tpu_custom_call.1} parent=1 // pred_check
      _
    $region19: #{tpu_custom_call.1} parent=1 // pred_check_branch
      %68 = sbr.rel (0) target = $region21
    $region20: #{tpu_custom_call.1} parent=1 // pred_region
      %70 = vsyncadd [#allocation9], 0
      %s71 = sshll.u32 %s4, 4
      %s72 = int_to_ptr.hbm [resolvable:$true] %s71
      %s73 = sshll.u32 [#allocation10], 4
      %s74 = int_to_ptr.vmem [resolvable:$true] %s73
      %79 = dma.hbm_to_vmem [thread:$0]  %s72, 8192, %s74, [#allocation9], 256, 256, 16
    $region21: #{tpu_custom_call.1} parent=1 // pred_fallthru
      _
    // Predicated region
    $region22: #{tpu_custom_call.1} parent=1 // pred_check
      _
    $region23: #{tpu_custom_call.1} parent=1 // pred_check_branch
      %81 = sbr.rel (0) target = $region25
    $region24: #{tpu_custom_call.1} parent=1 // pred_region
      _
    $region25: #{tpu_custom_call.1} parent=1 // pred_fallthru
      _
    // Predicated region
    $region26: #{tpu_custom_call.1} parent=1 // pred_check
      _
    $region27: #{tpu_custom_call.1} parent=1 // pred_check_branch
      %83 = sbr.rel (0) target = $region29
    $region28: #{tpu_custom_call.1} parent=1 // pred_region
      %85 = vsyncadd [#allocation12], 0
      %s86 = sshll.u32 %s6, 4
      %s87 = int_to_ptr.hbm [resolvable:$true] %s86
      %s88 = sshll.u32 [#allocation11], 4
      %s89 = int_to_ptr.vmem [resolvable:$true] %s88
      %94 = dma.hbm_to_vmem [thread:$0]  %s87, 8192, %s89, [#allocation12], 256, 256, 16
    $region29: #{tpu_custom_call.1} parent=1 // pred_fallthru
      _
    // Predicated region
    $region30: #{tpu_custom_call.1} parent=1 // pred_check
      _
    $region31: #{tpu_custom_call.1} parent=1 // pred_check_branch
      %96 = sbr.rel (0) target = $region33
    $region32: #{tpu_custom_call.1} parent=1 // pred_region
      %98 = vsyncadd [#allocation12], 0
      %s99 = sshll.u32 %s7, 4
      %s100 = int_to_ptr.hbm [resolvable:$true] %s99
      %s101 = sshll.u32 [#allocation13], 4
      %s102 = int_to_ptr.vmem [resolvable:$true] %s101
      %107 = dma.hbm_to_vmem [thread:$0]  %s100, 4096, %s102, [#allocation12], 128, 128, 8
    $region33: #{tpu_custom_call.1} parent=1 // pred_fallthru
      _
    // Predicated region
    $region34: #{tpu_custom_call.1} parent=1 // pred_check
      _
    $region35: #{tpu_custom_call.1} parent=1 // pred_check_branch
      %109 = sbr.rel (0) target = $region37
    $region36: #{tpu_custom_call.1} parent=1 // pred_region
      _
    $region37: #{tpu_custom_call.1} parent=1 // pred_fallthru
      _
    // Predicated region
    $region38: #{tpu_custom_call.1} parent=1 // pred_check
      _
    $region39: #{tpu_custom_call.1} parent=1 // pred_check_branch
      %111 = sbr.rel (0) target = $region41
    $region40: #{tpu_custom_call.1} parent=1 // pred_region
      %113 = dma.done [#allocation3], 256
    $region41: #{tpu_custom_call.1} parent=1 // pred_fallthru
      _
    // Predicated region
    $region42: #{tpu_custom_call.1} parent=1 // pred_check
      _
    $region43: #{tpu_custom_call.1} parent=1 // pred_check_branch
      %115 = sbr.rel (0) target = $region45
    $region44: #{tpu_custom_call.1} parent=1 // pred_region
      %117 = dma.done [#allocation6], 8192
    $region45: #{tpu_custom_call.1} parent=1 // pred_fallthru
      _
    // Predicated region
    $region46: #{tpu_custom_call.1} parent=1 // pred_check
      _
    $region47: #{tpu_custom_call.1} parent=1 // pred_check_branch
      %119 = sbr.rel (0) target = $region49
    $region48: #{tpu_custom_call.1} parent=1 // pred_region
      %121 = dma.done [#allocation6], 32
    $region49: #{tpu_custom_call.1} parent=1 // pred_fallthru
      _
    // Predicated region
    $region50: #{tpu_custom_call.1} parent=1 // pred_check
      _
    $region51: #{tpu_custom_call.1} parent=1 // pred_check_branch
      %123 = sbr.rel (0) target = $region53
    $region52: #{tpu_custom_call.1} parent=1 // pred_region
      %125 = dma.done [#allocation9], 8192
    $region53: #{tpu_custom_call.1} parent=1 // pred_fallthru
      _
    // Predicated region
    $region54: #{tpu_custom_call.1} parent=1 // pred_check
      _
    $region55: #{tpu_custom_call.1} parent=1 // pred_check_branch
      %127 = sbr.rel (0) target = $region57
    $region56: #{tpu_custom_call.1} parent=1 // pred_region
      %129 = dma.done [#allocation9], 8192
    $region57: #{tpu_custom_call.1} parent=1 // pred_fallthru
      _
    // Predicated region
    $region58: #{tpu_custom_call.1} parent=1 // pred_check
      _
    $region59: #{tpu_custom_call.1} parent=1 // pred_check_branch
      %131 = sbr.rel (0) target = $region61
    $region60: #{tpu_custom_call.1} parent=1 // pred_region
      %133 = dma.done [#allocation12], 8192
    $region61: #{tpu_custom_call.1} parent=1 // pred_fallthru
      _
    // Predicated region
    $region62: #{tpu_custom_call.1} parent=1 // pred_check
      _
    $region63: #{tpu_custom_call.1} parent=1 // pred_check_branch
      %135 = sbr.rel (0) target = $region65
    $region64: #{tpu_custom_call.1} parent=1 // pred_region
      %137 = dma.done [#allocation12], 4096
    $region65: #{tpu_custom_call.1} parent=1 // pred_fallthru
      _
    %v138 = vld [vmem:[#allocation2] sm:$0xff]
    %v139 = vld [vmem:[#allocation2 + $0x8] sm:$0xff]
    %v140 = vld [vmem:[#allocation5] sm:$0xff]
    %v141 = vld [vmem:[#allocation5 + $0x8] sm:$0xff]
    %v142 = vld [vmem:[#allocation5 + $0x10] sm:$0xff]
    %v143 = vld [vmem:[#allocation5 + $0x18] sm:$0xff]
    %v144 = vld [vmem:[#allocation5 + $0x20] sm:$0xff]
    %v145 = vld [vmem:[#allocation5 + $0x28] sm:$0xff]
    %v146 = vld [vmem:[#allocation5 + $0x30] sm:$0xff]
    %v147 = vld [vmem:[#allocation5 + $0x38] sm:$0xff]
    %v148 = vld [vmem:[#allocation5 + $0x40] sm:$0xff]
    %v149 = vld [vmem:[#allocation5 + $0x48] sm:$0xff]
    %v150 = vld [vmem:[#allocation5 + $0x50] sm:$0xff]
    %v151 = vld [vmem:[#allocation5 + $0x58] sm:$0xff]
    %v152 = vld [vmem:[#allocation5 + $0x60] sm:$0xff]
    %v153 = vld [vmem:[#allocation5 + $0x68] sm:$0xff]
    %v154 = vld [vmem:[#allocation5 + $0x70] sm:$0xff]
    %v155 = vld [vmem:[#allocation5 + $0x78] sm:$0xff]
    %v156 = vld [vmem:[#allocation5 + $0x80] sm:$0xff]
    %v157 = vld [vmem:[#allocation5 + $0x88] sm:$0xff]
    %v158 = vld [vmem:[#allocation5 + $0x90] sm:$0xff]
    %v159 = vld [vmem:[#allocation5 + $0x98] sm:$0xff]
    %v160 = vld [vmem:[#allocation5 + $0xa0] sm:$0xff]
    %v161 = vld [vmem:[#allocation5 + $0xa8] sm:$0xff]
    %v162 = vld [vmem:[#allocation5 + $0xb0] sm:$0xff]
    %v163 = vld [vmem:[#allocation5 + $0xb8] sm:$0xff]
    %v164 = vld [vmem:[#allocation5 + $0xc0] sm:$0xff]
    %v165 = vld [vmem:[#allocation5 + $0xc8] sm:$0xff]
    %v166 = vld [vmem:[#allocation5 + $0xd0] sm:$0xff]
    %v167 = vld [vmem:[#allocation5 + $0xd8] sm:$0xff]
    %v168 = vld [vmem:[#allocation5 + $0xe0] sm:$0xff]
    %v169 = vld [vmem:[#allocation5 + $0xe8] sm:$0xff]
    %v170 = vld [vmem:[#allocation5 + $0xf0] sm:$0xff]
    %v171 = vld [vmem:[#allocation5 + $0xf8] sm:$0xff]
    %v172 = vld [vmem:[#allocation5 + $0x100] sm:$0xff]
    %v173 = vld [vmem:[#allocation5 + $0x108] sm:$0xff]
    %v174 = vld [vmem:[#allocation5 + $0x110] sm:$0xff]
    %v175 = vld [vmem:[#allocation5 + $0x118] sm:$0xff]
    %v176 = vld [vmem:[#allocation5 + $0x120] sm:$0xff]
    %v177 = vld [vmem:[#allocation5 + $0x128] sm:$0xff]
    %v178 = vld [vmem:[#allocation5 + $0x130] sm:$0xff]
    %v179 = vld [vmem:[#allocation5 + $0x138] sm:$0xff]
    %v180 = vld [vmem:[#allocation5 + $0x140] sm:$0xff]
    %v181 = vld [vmem:[#allocation5 + $0x148] sm:$0xff]
    %v182 = vld [vmem:[#allocation5 + $0x150] sm:$0xff]
    %v183 = vld [vmem:[#allocation5 + $0x158] sm:$0xff]
    %v184 = vld [vmem:[#allocation5 + $0x160] sm:$0xff]
    %v185 = vld [vmem:[#allocation5 + $0x168] sm:$0xff]
    %v186 = vld [vmem:[#allocation5 + $0x170] sm:$0xff]
    %v187 = vld [vmem:[#allocation5 + $0x178] sm:$0xff]
    %v188 = vld [vmem:[#allocation5 + $0x180] sm:$0xff]
    %v189 = vld [vmem:[#allocation5 + $0x188] sm:$0xff]
    %v190 = vld [vmem:[#allocation5 + $0x190] sm:$0xff]
    %v191 = vld [vmem:[#allocation5 + $0x198] sm:$0xff]
    %v192 = vld [vmem:[#allocation5 + $0x1a0] sm:$0xff]
    %v193 = vld [vmem:[#allocation5 + $0x1a8] sm:$0xff]
    %v194 = vld [vmem:[#allocation5 + $0x1b0] sm:$0xff]
    %v195 = vld [vmem:[#allocation5 + $0x1b8] sm:$0xff]
    %v196 = vld [vmem:[#allocation5 + $0x1c0] sm:$0xff]
    %v197 = vld [vmem:[#allocation5 + $0x1c8] sm:$0xff]
    %v198 = vld [vmem:[#allocation5 + $0x1d0] sm:$0xff]
    %v199 = vld [vmem:[#allocation5 + $0x1d8] sm:$0xff]
    %v200 = vld [vmem:[#allocation5 + $0x1e0] sm:$0xff]
    %v201 = vld [vmem:[#allocation5 + $0x1e8] sm:$0xff]
    %v202 = vld [vmem:[#allocation5 + $0x1f0] sm:$0xff]
    %v203 = vld [vmem:[#allocation5 + $0x1f8] sm:$0xff]
    %v204 = vld [vmem:[#allocation7] sm:$0x3]
    %v206 = vperm.slane %v204, 0
    %v207 = vperm.slane %v204, 1
    %210 = vmatpush.msra.mxu0 %v170
    %211 = vmatpush.msra.mxu0 %v168
    %212 = vmatpush.msra.mxu0 %v166
    %213 = vmatpush.msra.mxu0 %v164
    %214 = vmatpush.msra.mxu0 %v162
    %215 = vmatpush.msra.mxu0 %v160
    %216 = vmatpush.msra.mxu0 %v158
    %217 = vmatpush.msra.mxu0 %v156
    %218 = vmatpush.msra.mxu0 %v154
    %219 = vmatpush.msra.mxu0 %v152
    %220 = vmatpush.msra.mxu0 %v150
    %221 = vmatpush.msra.mxu0 %v148
    %222 = vmatpush.msra.mxu0 %v146
    %223 = vmatpush.msra.mxu0 %v144
    %224 = vmatpush.msra.mxu0 %v142
    %225 = vmatpush.msra.mxu0 %v140
    %226 = vmatmul.f32.gmra.mxu0 %v138
    %v227 = vpop.f32.mrf.mxu0
    %v228 = vadd.f32 %v206, %v227
    %229 = vdwg.mxu0
    %230 = vmatpush.msra.mxu0 %v202
    %231 = vmatpush.msra.mxu0 %v200
    %232 = vmatpush.msra.mxu0 %v198
    %233 = vmatpush.msra.mxu0 %v196
    %234 = vmatpush.msra.mxu0 %v194
    %235 = vmatpush.msra.mxu0 %v192
    %236 = vmatpush.msra.mxu0 %v190
    %237 = vmatpush.msra.mxu0 %v188
    %238 = vmatpush.msra.mxu0 %v186
    %239 = vmatpush.msra.mxu0 %v184
    %240 = vmatpush.msra.mxu0 %v182
    %241 = vmatpush.msra.mxu0 %v180
    %242 = vmatpush.msra.mxu0 %v178
    %243 = vmatpush.msra.mxu0 %v176
    %244 = vmatpush.msra.mxu0 %v174
    %245 = vmatpush.msra.mxu0 %v172
    %246 = vmatmul.f32.gmra.mxu0 %v139
    %v247 = vpop.f32.mrf.mxu0
    %v248 = vadd.f32 %v228, %v247
    %249 = vdwg.mxu0
    %250 = vmatpush.msra.mxu0 %v171
    %251 = vmatpush.msra.mxu0 %v169
    %252 = vmatpush.msra.mxu0 %v167
    %253 = vmatpush.msra.mxu0 %v165
    %254 = vmatpush.msra.mxu0 %v163
    %255 = vmatpush.msra.mxu0 %v161
    %256 = vmatpush.msra.mxu0 %v159
    %257 = vmatpush.msra.mxu0 %v157
    %258 = vmatpush.msra.mxu0 %v155
    %259 = vmatpush.msra.mxu0 %v153
    %260 = vmatpush.msra.mxu0 %v151
    %261 = vmatpush.msra.mxu0 %v149
    %262 = vmatpush.msra.mxu0 %v147
    %263 = vmatpush.msra.mxu0 %v145
    %264 = vmatpush.msra.mxu0 %v143
    %265 = vmatpush.msra.mxu0 %v141
    %266 = vmatmul.f32.gmra.mxu0 %v138
    %v267 = vpop.f32.mrf.mxu0
    %v268 = vadd.f32 %v207, %v267
    %269 = vdwg.mxu0
    %270 = vmatpush.msra.mxu0 %v203
    %271 = vmatpush.msra.mxu0 %v201
    %272 = vmatpush.msra.mxu0 %v199
    %273 = vmatpush.msra.mxu0 %v197
    %274 = vmatpush.msra.mxu0 %v195
    %275 = vmatpush.msra.mxu0 %v193
    %276 = vmatpush.msra.mxu0 %v191
    %277 = vmatpush.msra.mxu0 %v189
    %278 = vmatpush.msra.mxu0 %v187
    %279 = vmatpush.msra.mxu0 %v185
    %280 = vmatpush.msra.mxu0 %v183
    %281 = vmatpush.msra.mxu0 %v181
    %282 = vmatpush.msra.mxu0 %v179
    %283 = vmatpush.msra.mxu0 %v177
    %284 = vmatpush.msra.mxu0 %v175
    %285 = vmatpush.msra.mxu0 %v173
    %286 = vmatmul.f32.gmra.mxu0 %v139
    %v287 = vpop.f32.mrf.mxu0
    %v288 = vadd.f32 %v268, %v287
    %289 = vdwg.mxu0
    %v290 = vld [vmem:[#allocation8] sm:$0xff]
    %v291 = vld [vmem:[#allocation8 + $0x8] sm:$0xff]
    %v292 = vld [vmem:[#allocation8 + $0x10] sm:$0xff]
    %v293 = vld [vmem:[#allocation8 + $0x18] sm:$0xff]
    %v294 = vld [vmem:[#allocation8 + $0x20] sm:$0xff]
    %v295 = vld [vmem:[#allocation8 + $0x28] sm:$0xff]
    %v296 = vld [vmem:[#allocation8 + $0x30] sm:$0xff]
    %v297 = vld [vmem:[#allocation8 + $0x38] sm:$0xff]
    %v298 = vld [vmem:[#allocation8 + $0x40] sm:$0xff]
    %v299 = vld [vmem:[#allocation8 + $0x48] sm:$0xff]
    %v300 = vld [vmem:[#allocation8 + $0x50] sm:$0xff]
    %v301 = vld [vmem:[#allocation8 + $0x58] sm:$0xff]
    %v302 = vld [vmem:[#allocation8 + $0x60] sm:$0xff]
    %v303 = vld [vmem:[#allocation8 + $0x68] sm:$0xff]
    %v304 = vld [vmem:[#allocation8 + $0x70] sm:$0xff]
    %v305 = vld [vmem:[#allocation8 + $0x78] sm:$0xff]
    %v306 = vld [vmem:[#allocation8 + $0x80] sm:$0xff]
    %v307 = vld [vmem:[#allocation8 + $0x88] sm:$0xff]
    %v308 = vld [vmem:[#allocation8 + $0x90] sm:$0xff]
    %v309 = vld [vmem:[#allocation8 + $0x98] sm:$0xff]
    %v310 = vld [vmem:[#allocation8 + $0xa0] sm:$0xff]
    %v311 = vld [vmem:[#allocation8 + $0xa8] sm:$0xff]
    %v312 = vld [vmem:[#allocation8 + $0xb0] sm:$0xff]
    %v313 = vld [vmem:[#allocation8 + $0xb8] sm:$0xff]
    %v314 = vld [vmem:[#allocation8 + $0xc0] sm:$0xff]
    %v315 = vld [vmem:[#allocation8 + $0xc8] sm:$0xff]
    %v316 = vld [vmem:[#allocation8 + $0xd0] sm:$0xff]
    %v317 = vld [vmem:[#allocation8 + $0xd8] sm:$0xff]
    %v318 = vld [vmem:[#allocation8 + $0xe0] sm:$0xff]
    %v319 = vld [vmem:[#allocation8 + $0xe8] sm:$0xff]
    %v320 = vld [vmem:[#allocation8 + $0xf0] sm:$0xff]
    %v321 = vld [vmem:[#allocation8 + $0xf8] sm:$0xff]
    %v322 = vld [vmem:[#allocation8 + $0x100] sm:$0xff]
    %v323 = vld [vmem:[#allocation8 + $0x108] sm:$0xff]
    %v324 = vld [vmem:[#allocation8 + $0x110] sm:$0xff]
    %v325 = vld [vmem:[#allocation8 + $0x118] sm:$0xff]
    %v326 = vld [vmem:[#allocation8 + $0x120] sm:$0xff]
    %v327 = vld [vmem:[#allocation8 + $0x128] sm:$0xff]
    %v328 = vld [vmem:[#allocation8 + $0x130] sm:$0xff]
    %v329 = vld [vmem:[#allocation8 + $0x138] sm:$0xff]
    %v330 = vld [vmem:[#allocation8 + $0x140] sm:$0xff]
    %v331 = vld [vmem:[#allocation8 + $0x148] sm:$0xff]
    %v332 = vld [vmem:[#allocation8 + $0x150] sm:$0xff]
    %v333 = vld [vmem:[#allocation8 + $0x158] sm:$0xff]
    %v334 = vld [vmem:[#allocation8 + $0x160] sm:$0xff]
    %v335 = vld [vmem:[#allocation8 + $0x168] sm:$0xff]
    %v336 = vld [vmem:[#allocation8 + $0x170] sm:$0xff]
    %v337 = vld [vmem:[#allocation8 + $0x178] sm:$0xff]
    %v338 = vld [vmem:[#allocation8 + $0x180] sm:$0xff]
    %v339 = vld [vmem:[#allocation8 + $0x188] sm:$0xff]
    %v340 = vld [vmem:[#allocation8 + $0x190] sm:$0xff]
    %v341 = vld [vmem:[#allocation8 + $0x198] sm:$0xff]
    %v342 = vld [vmem:[#allocation8 + $0x1a0] sm:$0xff]
    %v343 = vld [vmem:[#allocation8 + $0x1a8] sm:$0xff]
    %v344 = vld [vmem:[#allocation8 + $0x1b0] sm:$0xff]
    %v345 = vld [vmem:[#allocation8 + $0x1b8] sm:$0xff]
    %v346 = vld [vmem:[#allocation8 + $0x1c0] sm:$0xff]
    %v347 = vld [vmem:[#allocation8 + $0x1c8] sm:$0xff]
    %v348 = vld [vmem:[#allocation8 + $0x1d0] sm:$0xff]
    %v349 = vld [vmem:[#allocation8 + $0x1d8] sm:$0xff]
    %v350 = vld [vmem:[#allocation8 + $0x1e0] sm:$0xff]
    %v351 = vld [vmem:[#allocation8 + $0x1e8] sm:$0xff]
    %v352 = vld [vmem:[#allocation8 + $0x1f0] sm:$0xff]
    %v353 = vld [vmem:[#allocation8 + $0x1f8] sm:$0xff]
    %354 = vmatpush.msra.mxu0 %v320
    %355 = vmatpush.msra.mxu0 %v318
    %356 = vmatpush.msra.mxu0 %v316
    %357 = vmatpush.msra.mxu0 %v314
    %358 = vmatpush.msra.mxu0 %v312
    %359 = vmatpush.msra.mxu0 %v310
    %360 = vmatpush.msra.mxu0 %v308
    %361 = vmatpush.msra.mxu0 %v306
    %362 = vmatpush.msra.mxu0 %v304
    %363 = vmatpush.msra.mxu0 %v302
    %364 = vmatpush.msra.mxu0 %v300
    %365 = vmatpush.msra.mxu0 %v298
    %366 = vmatpush.msra.mxu0 %v296
    %367 = vmatpush.msra.mxu0 %v294
    %368 = vmatpush.msra.mxu0 %v292
    %369 = vmatpush.msra.mxu0 %v290
    %370 = vmatmul.f32.gmra.mxu0 %v248
    %v371 = vpop.f32.mrf.mxu0
    %v372 = vadd.f32 0.0, %v371
    %373 = vdwg.mxu0
    %374 = vmatpush.msra.mxu0 %v352
    %375 = vmatpush.msra.mxu0 %v350
    %376 = vmatpush.msra.mxu0 %v348
    %377 = vmatpush.msra.mxu0 %v346
    %378 = vmatpush.msra.mxu0 %v344
    %379 = vmatpush.msra.mxu0 %v342
    %380 = vmatpush.msra.mxu0 %v340
    %381 = vmatpush.msra.mxu0 %v338
    %382 = vmatpush.msra.mxu0 %v336
    %383 = vmatpush.msra.mxu0 %v334
    %384 = vmatpush.msra.mxu0 %v332
    %385 = vmatpush.msra.mxu0 %v330
    %386 = vmatpush.msra.mxu0 %v328
    %387 = vmatpush.msra.mxu0 %v326
    %388 = vmatpush.msra.mxu0 %v324
    %389 = vmatpush.msra.mxu0 %v322
    %390 = vmatmul.f32.gmra.mxu0 %v288
    %v391 = vpop.f32.mrf.mxu0
    %v392 = vadd.f32 %v372, %v391
    %393 = vdwg.mxu0
    %394 = vmatpush.msra.mxu0 %v321
    %395 = vmatpush.msra.mxu0 %v319
    %396 = vmatpush.msra.mxu0 %v317
    %397 = vmatpush.msra.mxu0 %v315
    %398 = vmatpush.msra.mxu0 %v313
    %399 = vmatpush.msra.mxu0 %v311
    %400 = vmatpush.msra.mxu0 %v309
    %401 = vmatpush.msra.mxu0 %v307
    %402 = vmatpush.msra.mxu0 %v305
    %403 = vmatpush.msra.mxu0 %v303
    %404 = vmatpush.msra.mxu0 %v301
    %405 = vmatpush.msra.mxu0 %v299
    %406 = vmatpush.msra.mxu0 %v297
    %407 = vmatpush.msra.mxu0 %v295
    %408 = vmatpush.msra.mxu0 %v293
    %409 = vmatpush.msra.mxu0 %v291
    %410 = vmatmul.f32.gmra.mxu0 %v248
    %v411 = vpop.f32.mrf.mxu0
    %v412 = vadd.f32 0.0, %v411
    %413 = vdwg.mxu0
    %414 = vmatpush.msra.mxu0 %v353
    %415 = vmatpush.msra.mxu0 %v351
    %416 = vmatpush.msra.mxu0 %v349
    %417 = vmatpush.msra.mxu0 %v347
    %418 = vmatpush.msra.mxu0 %v345
    %419 = vmatpush.msra.mxu0 %v343
    %420 = vmatpush.msra.mxu0 %v341
    %421 = vmatpush.msra.mxu0 %v339
    %422 = vmatpush.msra.mxu0 %v337
    %423 = vmatpush.msra.mxu0 %v335
    %424 = vmatpush.msra.mxu0 %v333
    %425 = vmatpush.msra.mxu0 %v331
    %426 = vmatpush.msra.mxu0 %v329
    %427 = vmatpush.msra.mxu0 %v327
    %428 = vmatpush.msra.mxu0 %v325
    %429 = vmatpush.msra.mxu0 %v323
    %430 = vmatmul.f32.gmra.mxu0 %v288
    %v431 = vpop.f32.mrf.mxu0
    %v432 = vadd.f32 %v412, %v431
    %433 = vdwg.mxu0
    %v434 = vsub.f32 %v248, %v392
    %v435 = vsub.f32 %v288, %v432
    %v436 = vmul.f32 %v434, %v434
    %v437 = vmul.f32 %v435, %v435
    %438 = vmatpush.msra.mxu0 %v320
    %439 = vmatpush.msra.mxu0 %v318
    %440 = vmatpush.msra.mxu0 %v316
    %441 = vmatpush.msra.mxu0 %v314
    %442 = vmatpush.msra.mxu0 %v312
    %443 = vmatpush.msra.mxu0 %v310
    %444 = vmatpush.msra.mxu0 %v308
    %445 = vmatpush.msra.mxu0 %v306
    %446 = vmatpush.msra.mxu0 %v304
    %447 = vmatpush.msra.mxu0 %v302
    %448 = vmatpush.msra.mxu0 %v300
    %449 = vmatpush.msra.mxu0 %v298
    %450 = vmatpush.msra.mxu0 %v296
    %451 = vmatpush.msra.mxu0 %v294
    %452 = vmatpush.msra.mxu0 %v292
    %453 = vmatpush.msra.mxu0 %v290
    %454 = vmatmul.f32.gmra.mxu0 %v436
    %v455 = vpop.f32.mrf.mxu0
    %v456 = vadd.f32 1e-05, %v455
    %457 = vdwg.mxu0
    %458 = vmatpush.msra.mxu0 %v352
    %459 = vmatpush.msra.mxu0 %v350
    %460 = vmatpush.msra.mxu0 %v348
    %461 = vmatpush.msra.mxu0 %v346
    %462 = vmatpush.msra.mxu0 %v344
    %463 = vmatpush.msra.mxu0 %v342
    %464 = vmatpush.msra.mxu0 %v340
    %465 = vmatpush.msra.mxu0 %v338
    %466 = vmatpush.msra.mxu0 %v336
    %467 = vmatpush.msra.mxu0 %v334
    %468 = vmatpush.msra.mxu0 %v332
    %469 = vmatpush.msra.mxu0 %v330
    %470 = vmatpush.msra.mxu0 %v328
    %471 = vmatpush.msra.mxu0 %v326
    %472 = vmatpush.msra.mxu0 %v324
    %473 = vmatpush.msra.mxu0 %v322
    %474 = vmatmul.f32.gmra.mxu0 %v437
    %v475 = vpop.f32.mrf.mxu0
    %v476 = vadd.f32 %v456, %v475
    %477 = vdwg.mxu0
    %478 = vmatpush.msra.mxu0 %v321
    %479 = vmatpush.msra.mxu0 %v319
    %480 = vmatpush.msra.mxu0 %v317
    %481 = vmatpush.msra.mxu0 %v315
    %482 = vmatpush.msra.mxu0 %v313
    %483 = vmatpush.msra.mxu0 %v311
    %484 = vmatpush.msra.mxu0 %v309
    %485 = vmatpush.msra.mxu0 %v307
    %486 = vmatpush.msra.mxu0 %v305
    %487 = vmatpush.msra.mxu0 %v303
    %488 = vmatpush.msra.mxu0 %v301
    %489 = vmatpush.msra.mxu0 %v299
    %490 = vmatpush.msra.mxu0 %v297
    %491 = vmatpush.msra.mxu0 %v295
    %492 = vmatpush.msra.mxu0 %v293
    %493 = vmatpush.msra.mxu0 %v291
    %494 = vmatmul.f32.gmra.mxu0 %v436
    %v495 = vpop.f32.mrf.mxu0
    %v496 = vadd.f32 1e-05, %v495
    %497 = vdwg.mxu0
    %498 = vmatpush.msra.mxu0 %v353
    %499 = vmatpush.msra.mxu0 %v351
    %500 = vmatpush.msra.mxu0 %v349
    %501 = vmatpush.msra.mxu0 %v347
    %502 = vmatpush.msra.mxu0 %v345
    %503 = vmatpush.msra.mxu0 %v343
    %504 = vmatpush.msra.mxu0 %v341
    %505 = vmatpush.msra.mxu0 %v339
    %506 = vmatpush.msra.mxu0 %v337
    %507 = vmatpush.msra.mxu0 %v335
    %508 = vmatpush.msra.mxu0 %v333
    %509 = vmatpush.msra.mxu0 %v331
    %510 = vmatpush.msra.mxu0 %v329
    %511 = vmatpush.msra.mxu0 %v327
    %512 = vmatpush.msra.mxu0 %v325
    %513 = vmatpush.msra.mxu0 %v323
    %514 = vmatmul.f32.gmra.mxu0 %v437
    %v515 = vpop.f32.mrf.mxu0
    %v516 = vadd.f32 %v496, %v515
    %517 = vdwg.mxu0
    %v518 = vrsqrt.pop %v476
    %v519 = vmul.f32 %v518, %v476
    %v520 = vmul.f32 %v519, %v518
    %v521 = vmul.f32 0.5, %v520
    %v522 = vsub.f32 1.5, %v521
    %v523 = vmul.f32 %v518, %v522
    %vm524 = vweird.f32 %v476
    %vm525 = vweird.f32 %v518
    %vm526 = vmor %vm524, %vm525
    %v527 = vsel %vm526, %v518, %v523
    %v528 = vrsqrt.pop %v516
    %v529 = vmul.f32 %v528, %v516
    %v530 = vmul.f32 %v529, %v528
    %v531 = vmul.f32 0.5, %v530
    %v532 = vsub.f32 1.5, %v531
    %v533 = vmul.f32 %v528, %v532
    %vm534 = vweird.f32 %v516
    %vm535 = vweird.f32 %v528
    %vm536 = vmor %vm534, %vm535
    %v537 = vsel %vm536, %v528, %v533
    %v538 = vmul.f32 %v434, %v527
    %v539 = vmul.f32 %v435, %v537
    %v540 = vmax.f32 %v538, 0.0
    %v541 = vmax.f32 %v539, 0.0
    %v542 = vld [vmem:[#allocation10] sm:$0xff]
    %v543 = vld [vmem:[#allocation10 + $0x8] sm:$0xff]
    %v544 = vld [vmem:[#allocation10 + $0x10] sm:$0xff]
    %v545 = vld [vmem:[#allocation10 + $0x18] sm:$0xff]
    %v546 = vld [vmem:[#allocation10 + $0x20] sm:$0xff]
    %v547 = vld [vmem:[#allocation10 + $0x28] sm:$0xff]
    %v548 = vld [vmem:[#allocation10 + $0x30] sm:$0xff]
    %v549 = vld [vmem:[#allocation10 + $0x38] sm:$0xff]
    %v550 = vld [vmem:[#allocation10 + $0x40] sm:$0xff]
    %v551 = vld [vmem:[#allocation10 + $0x48] sm:$0xff]
    %v552 = vld [vmem:[#allocation10 + $0x50] sm:$0xff]
    %v553 = vld [vmem:[#allocation10 + $0x58] sm:$0xff]
    %v554 = vld [vmem:[#allocation10 + $0x60] sm:$0xff]
    %v555 = vld [vmem:[#allocation10 + $0x68] sm:$0xff]
    %v556 = vld [vmem:[#allocation10 + $0x70] sm:$0xff]
    %v557 = vld [vmem:[#allocation10 + $0x78] sm:$0xff]
    %v558 = vld [vmem:[#allocation10 + $0x80] sm:$0xff]
    %v559 = vld [vmem:[#allocation10 + $0x88] sm:$0xff]
    %v560 = vld [vmem:[#allocation10 + $0x90] sm:$0xff]
    %v561 = vld [vmem:[#allocation10 + $0x98] sm:$0xff]
    %v562 = vld [vmem:[#allocation10 + $0xa0] sm:$0xff]
    %v563 = vld [vmem:[#allocation10 + $0xa8] sm:$0xff]
    %v564 = vld [vmem:[#allocation10 + $0xb0] sm:$0xff]
    %v565 = vld [vmem:[#allocation10 + $0xb8] sm:$0xff]
    %v566 = vld [vmem:[#allocation10 + $0xc0] sm:$0xff]
    %v567 = vld [vmem:[#allocation10 + $0xc8] sm:$0xff]
    %v568 = vld [vmem:[#allocation10 + $0xd0] sm:$0xff]
    %v569 = vld [vmem:[#allocation10 + $0xd8] sm:$0xff]
    %v570 = vld [vmem:[#allocation10 + $0xe0] sm:$0xff]
    %v571 = vld [vmem:[#allocation10 + $0xe8] sm:$0xff]
    %v572 = vld [vmem:[#allocation10 + $0xf0] sm:$0xff]
    %v573 = vld [vmem:[#allocation10 + $0xf8] sm:$0xff]
    %v574 = vld [vmem:[#allocation10 + $0x100] sm:$0xff]
    %v575 = vld [vmem:[#allocation10 + $0x108] sm:$0xff]
    %v576 = vld [vmem:[#allocation10 + $0x110] sm:$0xff]
    %v577 = vld [vmem:[#allocation10 + $0x118] sm:$0xff]
    %v578 = vld [vmem:[#allocation10 + $0x120] sm:$0xff]
    %v579 = vld [vmem:[#allocation10 + $0x128] sm:$0xff]
    %v580 = vld [vmem:[#allocation10 + $0x130] sm:$0xff]
    %v581 = vld [vmem:[#allocation10 + $0x138] sm:$0xff]
    %v582 = vld [vmem:[#allocation10 + $0x140] sm:$0xff]
    %v583 = vld [vmem:[#allocation10 + $0x148] sm:$0xff]
    %v584 = vld [vmem:[#allocation10 + $0x150] sm:$0xff]
    %v585 = vld [vmem:[#allocation10 + $0x158] sm:$0xff]
    %v586 = vld [vmem:[#allocation10 + $0x160] sm:$0xff]
    %v587 = vld [vmem:[#allocation10 + $0x168] sm:$0xff]
    %v588 = vld [vmem:[#allocation10 + $0x170] sm:$0xff]
    %v589 = vld [vmem:[#allocation10 + $0x178] sm:$0xff]
    %v590 = vld [vmem:[#allocation10 + $0x180] sm:$0xff]
    %v591 = vld [vmem:[#allocation10 + $0x188] sm:$0xff]
    %v592 = vld [vmem:[#allocation10 + $0x190] sm:$0xff]
    %v593 = vld [vmem:[#allocation10 + $0x198] sm:$0xff]
    %v594 = vld [vmem:[#allocation10 + $0x1a0] sm:$0xff]
    %v595 = vld [vmem:[#allocation10 + $0x1a8] sm:$0xff]
    %v596 = vld [vmem:[#allocation10 + $0x1b0] sm:$0xff]
    %v597 = vld [vmem:[#allocation10 + $0x1b8] sm:$0xff]
    %v598 = vld [vmem:[#allocation10 + $0x1c0] sm:$0xff]
    %v599 = vld [vmem:[#allocation10 + $0x1c8] sm:$0xff]
    %v600 = vld [vmem:[#allocation10 + $0x1d0] sm:$0xff]
    %v601 = vld [vmem:[#allocation10 + $0x1d8] sm:$0xff]
    %v602 = vld [vmem:[#allocation10 + $0x1e0] sm:$0xff]
    %v603 = vld [vmem:[#allocation10 + $0x1e8] sm:$0xff]
    %v604 = vld [vmem:[#allocation10 + $0x1f0] sm:$0xff]
    %v605 = vld [vmem:[#allocation10 + $0x1f8] sm:$0xff]
    %v606 = vld [vmem:[%s5] sm:$0x3]
    %v608 = vperm.slane %v606, 0
    %v609 = vperm.slane %v606, 1
    %612 = vmatpush.msra.mxu0 %v572
    %613 = vmatpush.msra.mxu0 %v570
    %614 = vmatpush.msra.mxu0 %v568
    %615 = vmatpush.msra.mxu0 %v566
    %616 = vmatpush.msra.mxu0 %v564
    %617 = vmatpush.msra.mxu0 %v562
    %618 = vmatpush.msra.mxu0 %v560
    %619 = vmatpush.msra.mxu0 %v558
    %620 = vmatpush.msra.mxu0 %v556
    %621 = vmatpush.msra.mxu0 %v554
    %622 = vmatpush.msra.mxu0 %v552
    %623 = vmatpush.msra.mxu0 %v550
    %624 = vmatpush.msra.mxu0 %v548
    %625 = vmatpush.msra.mxu0 %v546
    %626 = vmatpush.msra.mxu0 %v544
    %627 = vmatpush.msra.mxu0 %v542
    %628 = vmatmul.f32.gmra.mxu0 %v540
    %v629 = vpop.f32.mrf.mxu0
    %v630 = vadd.f32 %v608, %v629
    %631 = vdwg.mxu0
    %632 = vmatpush.msra.mxu0 %v604
    %633 = vmatpush.msra.mxu0 %v602
    %634 = vmatpush.msra.mxu0 %v600
    %635 = vmatpush.msra.mxu0 %v598
    %636 = vmatpush.msra.mxu0 %v596
    %637 = vmatpush.msra.mxu0 %v594
    %638 = vmatpush.msra.mxu0 %v592
    %639 = vmatpush.msra.mxu0 %v590
    %640 = vmatpush.msra.mxu0 %v588
    %641 = vmatpush.msra.mxu0 %v586
    %642 = vmatpush.msra.mxu0 %v584
    %643 = vmatpush.msra.mxu0 %v582
    %644 = vmatpush.msra.mxu0 %v580
    %645 = vmatpush.msra.mxu0 %v578
    %646 = vmatpush.msra.mxu0 %v576
    %647 = vmatpush.msra.mxu0 %v574
    %648 = vmatmul.f32.gmra.mxu0 %v541
    %v649 = vpop.f32.mrf.mxu0
    %v650 = vadd.f32 %v630, %v649
    %651 = vdwg.mxu0
    %652 = vmatpush.msra.mxu0 %v573
    %653 = vmatpush.msra.mxu0 %v571
    %654 = vmatpush.msra.mxu0 %v569
    %655 = vmatpush.msra.mxu0 %v567
    %656 = vmatpush.msra.mxu0 %v565
    %657 = vmatpush.msra.mxu0 %v563
    %658 = vmatpush.msra.mxu0 %v561
    %659 = vmatpush.msra.mxu0 %v559
    %660 = vmatpush.msra.mxu0 %v557
    %661 = vmatpush.msra.mxu0 %v555
    %662 = vmatpush.msra.mxu0 %v553
    %663 = vmatpush.msra.mxu0 %v551
    %664 = vmatpush.msra.mxu0 %v549
    %665 = vmatpush.msra.mxu0 %v547
    %666 = vmatpush.msra.mxu0 %v545
    %667 = vmatpush.msra.mxu0 %v543
    %668 = vmatmul.f32.gmra.mxu0 %v540
    %v669 = vpop.f32.mrf.mxu0
    %v670 = vadd.f32 %v609, %v669
    %671 = vdwg.mxu0
    %672 = vmatpush.msra.mxu0 %v605
    %673 = vmatpush.msra.mxu0 %v603
    %674 = vmatpush.msra.mxu0 %v601
    %675 = vmatpush.msra.mxu0 %v599
    %676 = vmatpush.msra.mxu0 %v597
    %677 = vmatpush.msra.mxu0 %v595
    %678 = vmatpush.msra.mxu0 %v593
    %679 = vmatpush.msra.mxu0 %v591
    %680 = vmatpush.msra.mxu0 %v589
    %681 = vmatpush.msra.mxu0 %v587
    %682 = vmatpush.msra.mxu0 %v585
    %683 = vmatpush.msra.mxu0 %v583
    %684 = vmatpush.msra.mxu0 %v581
    %685 = vmatpush.msra.mxu0 %v579
    %686 = vmatpush.msra.mxu0 %v577
    %687 = vmatpush.msra.mxu0 %v575
    %688 = vmatmul.f32.gmra.mxu0 %v541
    %v689 = vpop.f32.mrf.mxu0
    %v690 = vadd.f32 %v670, %v689
    %691 = vdwg.mxu0
    %v692 = vld [vmem:[#allocation11] sm:$0xff]
    %v693 = vld [vmem:[#allocation11 + $0x8] sm:$0xff]
    %v694 = vld [vmem:[#allocation11 + $0x10] sm:$0xff]
    %v695 = vld [vmem:[#allocation11 + $0x18] sm:$0xff]
    %v696 = vld [vmem:[#allocation11 + $0x20] sm:$0xff]
    %v697 = vld [vmem:[#allocation11 + $0x28] sm:$0xff]
    %v698 = vld [vmem:[#allocation11 + $0x30] sm:$0xff]
    %v699 = vld [vmem:[#allocation11 + $0x38] sm:$0xff]
    %v700 = vld [vmem:[#allocation11 + $0x40] sm:$0xff]
    %v701 = vld [vmem:[#allocation11 + $0x48] sm:$0xff]
    %v702 = vld [vmem:[#allocation11 + $0x50] sm:$0xff]
    %v703 = vld [vmem:[#allocation11 + $0x58] sm:$0xff]
    %v704 = vld [vmem:[#allocation11 + $0x60] sm:$0xff]
    %v705 = vld [vmem:[#allocation11 + $0x68] sm:$0xff]
    %v706 = vld [vmem:[#allocation11 + $0x70] sm:$0xff]
    %v707 = vld [vmem:[#allocation11 + $0x78] sm:$0xff]
    %v708 = vld [vmem:[#allocation11 + $0x80] sm:$0xff]
    %v709 = vld [vmem:[#allocation11 + $0x88] sm:$0xff]
    %v710 = vld [vmem:[#allocation11 + $0x90] sm:$0xff]
    %v711 = vld [vmem:[#allocation11 + $0x98] sm:$0xff]
    %v712 = vld [vmem:[#allocation11 + $0xa0] sm:$0xff]
    %v713 = vld [vmem:[#allocation11 + $0xa8] sm:$0xff]
    %v714 = vld [vmem:[#allocation11 + $0xb0] sm:$0xff]
    %v715 = vld [vmem:[#allocation11 + $0xb8] sm:$0xff]
    %v716 = vld [vmem:[#allocation11 + $0xc0] sm:$0xff]
    %v717 = vld [vmem:[#allocation11 + $0xc8] sm:$0xff]
    %v718 = vld [vmem:[#allocation11 + $0xd0] sm:$0xff]
    %v719 = vld [vmem:[#allocation11 + $0xd8] sm:$0xff]
    %v720 = vld [vmem:[#allocation11 + $0xe0] sm:$0xff]
    %v721 = vld [vmem:[#allocation11 + $0xe8] sm:$0xff]
    %v722 = vld [vmem:[#allocation11 + $0xf0] sm:$0xff]
    %v723 = vld [vmem:[#allocation11 + $0xf8] sm:$0xff]
    %v724 = vld [vmem:[#allocation11 + $0x100] sm:$0xff]
    %v725 = vld [vmem:[#allocation11 + $0x108] sm:$0xff]
    %v726 = vld [vmem:[#allocation11 + $0x110] sm:$0xff]
    %v727 = vld [vmem:[#allocation11 + $0x118] sm:$0xff]
    %v728 = vld [vmem:[#allocation11 + $0x120] sm:$0xff]
    %v729 = vld [vmem:[#allocation11 + $0x128] sm:$0xff]
    %v730 = vld [vmem:[#allocation11 + $0x130] sm:$0xff]
    %v731 = vld [vmem:[#allocation11 + $0x138] sm:$0xff]
    %v732 = vld [vmem:[#allocation11 + $0x140] sm:$0xff]
    %v733 = vld [vmem:[#allocation11 + $0x148] sm:$0xff]
    %v734 = vld [vmem:[#allocation11 + $0x150] sm:$0xff]
    %v735 = vld [vmem:[#allocation11 + $0x158] sm:$0xff]
    %v736 = vld [vmem:[#allocation11 + $0x160] sm:$0xff]
    %v737 = vld [vmem:[#allocation11 + $0x168] sm:$0xff]
    %v738 = vld [vmem:[#allocation11 + $0x170] sm:$0xff]
    %v739 = vld [vmem:[#allocation11 + $0x178] sm:$0xff]
    %v740 = vld [vmem:[#allocation11 + $0x180] sm:$0xff]
    %v741 = vld [vmem:[#allocation11 + $0x188] sm:$0xff]
    %v742 = vld [vmem:[#allocation11 + $0x190] sm:$0xff]
    %v743 = vld [vmem:[#allocation11 + $0x198] sm:$0xff]
    %v744 = vld [vmem:[#allocation11 + $0x1a0] sm:$0xff]
    %v745 = vld [vmem:[#allocation11 + $0x1a8] sm:$0xff]
    %v746 = vld [vmem:[#allocation11 + $0x1b0] sm:$0xff]
    %v747 = vld [vmem:[#allocation11 + $0x1b8] sm:$0xff]
    %v748 = vld [vmem:[#allocation11 + $0x1c0] sm:$0xff]
    %v749 = vld [vmem:[#allocation11 + $0x1c8] sm:$0xff]
    %v750 = vld [vmem:[#allocation11 + $0x1d0] sm:$0xff]
    %v751 = vld [vmem:[#allocation11 + $0x1d8] sm:$0xff]
    %v752 = vld [vmem:[#allocation11 + $0x1e0] sm:$0xff]
    %v753 = vld [vmem:[#allocation11 + $0x1e8] sm:$0xff]
    %v754 = vld [vmem:[#allocation11 + $0x1f0] sm:$0xff]
    %v755 = vld [vmem:[#allocation11 + $0x1f8] sm:$0xff]
    %756 = vmatpush.msra.mxu0 %v722
    %757 = vmatpush.msra.mxu0 %v720
    %758 = vmatpush.msra.mxu0 %v718
    %759 = vmatpush.msra.mxu0 %v716
    %760 = vmatpush.msra.mxu0 %v714
    %761 = vmatpush.msra.mxu0 %v712
    %762 = vmatpush.msra.mxu0 %v710
    %763 = vmatpush.msra.mxu0 %v708
    %764 = vmatpush.msra.mxu0 %v706
    %765 = vmatpush.msra.mxu0 %v704
    %766 = vmatpush.msra.mxu0 %v702
    %767 = vmatpush.msra.mxu0 %v700
    %768 = vmatpush.msra.mxu0 %v698
    %769 = vmatpush.msra.mxu0 %v696
    %770 = vmatpush.msra.mxu0 %v694
    %771 = vmatpush.msra.mxu0 %v692
    %772 = vmatmul.f32.gmra.mxu0 %v650
    %v773 = vpop.f32.mrf.mxu0
    %v774 = vadd.f32 0.0, %v773
    %775 = vdwg.mxu0
    %776 = vmatpush.msra.mxu0 %v754
    %777 = vmatpush.msra.mxu0 %v752
    %778 = vmatpush.msra.mxu0 %v750
    %779 = vmatpush.msra.mxu0 %v748
    %780 = vmatpush.msra.mxu0 %v746
    %781 = vmatpush.msra.mxu0 %v744
    %782 = vmatpush.msra.mxu0 %v742
    %783 = vmatpush.msra.mxu0 %v740
    %784 = vmatpush.msra.mxu0 %v738
    %785 = vmatpush.msra.mxu0 %v736
    %786 = vmatpush.msra.mxu0 %v734
    %787 = vmatpush.msra.mxu0 %v732
    %788 = vmatpush.msra.mxu0 %v730
    %789 = vmatpush.msra.mxu0 %v728
    %790 = vmatpush.msra.mxu0 %v726
    %791 = vmatpush.msra.mxu0 %v724
    %792 = vmatmul.f32.gmra.mxu0 %v690
    %v793 = vpop.f32.mrf.mxu0
    %v794 = vadd.f32 %v774, %v793
    %795 = vdwg.mxu0
    %796 = vmatpush.msra.mxu0 %v723
    %797 = vmatpush.msra.mxu0 %v721
    %798 = vmatpush.msra.mxu0 %v719
    %799 = vmatpush.msra.mxu0 %v717
    %800 = vmatpush.msra.mxu0 %v715
    %801 = vmatpush.msra.mxu0 %v713
    %802 = vmatpush.msra.mxu0 %v711
    %803 = vmatpush.msra.mxu0 %v709
    %804 = vmatpush.msra.mxu0 %v707
    %805 = vmatpush.msra.mxu0 %v705
    %806 = vmatpush.msra.mxu0 %v703
    %807 = vmatpush.msra.mxu0 %v701
    %808 = vmatpush.msra.mxu0 %v699
    %809 = vmatpush.msra.mxu0 %v697
    %810 = vmatpush.msra.mxu0 %v695
    %811 = vmatpush.msra.mxu0 %v693
    %812 = vmatmul.f32.gmra.mxu0 %v650
    %v813 = vpop.f32.mrf.mxu0
    %v814 = vadd.f32 0.0, %v813
    %815 = vdwg.mxu0
    %816 = vmatpush.msra.mxu0 %v755
    %817 = vmatpush.msra.mxu0 %v753
    %818 = vmatpush.msra.mxu0 %v751
    %819 = vmatpush.msra.mxu0 %v749
    %820 = vmatpush.msra.mxu0 %v747
    %821 = vmatpush.msra.mxu0 %v745
    %822 = vmatpush.msra.mxu0 %v743
    %823 = vmatpush.msra.mxu0 %v741
    %824 = vmatpush.msra.mxu0 %v739
    %825 = vmatpush.msra.mxu0 %v737
    %826 = vmatpush.msra.mxu0 %v735
    %827 = vmatpush.msra.mxu0 %v733
    %828 = vmatpush.msra.mxu0 %v731
    %829 = vmatpush.msra.mxu0 %v729
    %830 = vmatpush.msra.mxu0 %v727
    %831 = vmatpush.msra.mxu0 %v725
    %832 = vmatmul.f32.gmra.mxu0 %v690
    %v833 = vpop.f32.mrf.mxu0
    %v834 = vadd.f32 %v814, %v833
    %835 = vdwg.mxu0
    %v836 = vsub.f32 %v650, %v794
    %v837 = vsub.f32 %v690, %v834
    %v838 = vmul.f32 %v836, %v836
    %v839 = vmul.f32 %v837, %v837
    %840 = vmatpush.msra.mxu0 %v722
    %841 = vmatpush.msra.mxu0 %v720
    %842 = vmatpush.msra.mxu0 %v718
    %843 = vmatpush.msra.mxu0 %v716
    %844 = vmatpush.msra.mxu0 %v714
    %845 = vmatpush.msra.mxu0 %v712
    %846 = vmatpush.msra.mxu0 %v710
    %847 = vmatpush.msra.mxu0 %v708
    %848 = vmatpush.msra.mxu0 %v706
    %849 = vmatpush.msra.mxu0 %v704
    %850 = vmatpush.msra.mxu0 %v702
    %851 = vmatpush.msra.mxu0 %v700
    %852 = vmatpush.msra.mxu0 %v698
    %853 = vmatpush.msra.mxu0 %v696
    %854 = vmatpush.msra.mxu0 %v694
    %855 = vmatpush.msra.mxu0 %v692
    %856 = vmatmul.f32.gmra.mxu0 %v838
    %v857 = vpop.f32.mrf.mxu0
    %v858 = vadd.f32 1e-05, %v857
    %859 = vdwg.mxu0
    %860 = vmatpush.msra.mxu0 %v754
    %861 = vmatpush.msra.mxu0 %v752
    %862 = vmatpush.msra.mxu0 %v750
    %863 = vmatpush.msra.mxu0 %v748
    %864 = vmatpush.msra.mxu0 %v746
    %865 = vmatpush.msra.mxu0 %v744
    %866 = vmatpush.msra.mxu0 %v742
    %867 = vmatpush.msra.mxu0 %v740
    %868 = vmatpush.msra.mxu0 %v738
    %869 = vmatpush.msra.mxu0 %v736
    %870 = vmatpush.msra.mxu0 %v734
    %871 = vmatpush.msra.mxu0 %v732
    %872 = vmatpush.msra.mxu0 %v730
    %873 = vmatpush.msra.mxu0 %v728
    %874 = vmatpush.msra.mxu0 %v726
    %875 = vmatpush.msra.mxu0 %v724
    %876 = vmatmul.f32.gmra.mxu0 %v839
    %v877 = vpop.f32.mrf.mxu0
    %v878 = vadd.f32 %v858, %v877
    %879 = vdwg.mxu0
    %880 = vmatpush.msra.mxu0 %v723
    %881 = vmatpush.msra.mxu0 %v721
    %882 = vmatpush.msra.mxu0 %v719
    %883 = vmatpush.msra.mxu0 %v717
    %884 = vmatpush.msra.mxu0 %v715
    %885 = vmatpush.msra.mxu0 %v713
    %886 = vmatpush.msra.mxu0 %v711
    %887 = vmatpush.msra.mxu0 %v709
    %888 = vmatpush.msra.mxu0 %v707
    %889 = vmatpush.msra.mxu0 %v705
    %890 = vmatpush.msra.mxu0 %v703
    %891 = vmatpush.msra.mxu0 %v701
    %892 = vmatpush.msra.mxu0 %v699
    %893 = vmatpush.msra.mxu0 %v697
    %894 = vmatpush.msra.mxu0 %v695
    %895 = vmatpush.msra.mxu0 %v693
    %896 = vmatmul.f32.gmra.mxu0 %v838
    %v897 = vpop.f32.mrf.mxu0
    %v898 = vadd.f32 1e-05, %v897
    %899 = vdwg.mxu0
    %900 = vmatpush.msra.mxu0 %v755
    %901 = vmatpush.msra.mxu0 %v753
    %902 = vmatpush.msra.mxu0 %v751
    %903 = vmatpush.msra.mxu0 %v749
    %904 = vmatpush.msra.mxu0 %v747
    %905 = vmatpush.msra.mxu0 %v745
    %906 = vmatpush.msra.mxu0 %v743
    %907 = vmatpush.msra.mxu0 %v741
    %908 = vmatpush.msra.mxu0 %v739
    %909 = vmatpush.msra.mxu0 %v737
    %910 = vmatpush.msra.mxu0 %v735
    %911 = vmatpush.msra.mxu0 %v733
    %912 = vmatpush.msra.mxu0 %v731
    %913 = vmatpush.msra.mxu0 %v729
    %914 = vmatpush.msra.mxu0 %v727
    %915 = vmatpush.msra.mxu0 %v725
    %916 = vmatmul.f32.gmra.mxu0 %v839
    %v917 = vpop.f32.mrf.mxu0
    %v918 = vadd.f32 %v898, %v917
    %919 = vdwg.mxu0
    %v920 = vrsqrt.pop %v878
    %v921 = vmul.f32 %v920, %v878
    %v922 = vmul.f32 %v921, %v920
    %v923 = vmul.f32 0.5, %v922
    %v924 = vsub.f32 1.5, %v923
    %v925 = vmul.f32 %v920, %v924
    %vm926 = vweird.f32 %v878
    %vm927 = vweird.f32 %v920
    %vm928 = vmor %vm926, %vm927
    %v929 = vsel %vm928, %v920, %v925
    %v930 = vrsqrt.pop %v918
    %v931 = vmul.f32 %v930, %v918
    %v932 = vmul.f32 %v931, %v930
    %v933 = vmul.f32 0.5, %v932
    %v934 = vsub.f32 1.5, %v933
    %v935 = vmul.f32 %v930, %v934
    %vm936 = vweird.f32 %v918
    %vm937 = vweird.f32 %v930
    %vm938 = vmor %vm936, %vm937
    %v939 = vsel %vm938, %v930, %v935
    %v940 = vmul.f32 %v836, %v929
    %v941 = vmul.f32 %v837, %v939
    %v942 = vmax.f32 %v940, 0.0
    %v943 = vmax.f32 %v941, 0.0
    %v944 = vld [vmem:[#allocation13] sm:$0xff]
    %v945 = vld [vmem:[#allocation13 + $0x8] sm:$0xff]
    %v946 = vld [vmem:[#allocation13 + $0x10] sm:$0xff]
    %v947 = vld [vmem:[#allocation13 + $0x18] sm:$0xff]
    %v948 = vld [vmem:[#allocation13 + $0x20] sm:$0xff]
    %v949 = vld [vmem:[#allocation13 + $0x28] sm:$0xff]
    %v950 = vld [vmem:[#allocation13 + $0x30] sm:$0xff]
    %v951 = vld [vmem:[#allocation13 + $0x38] sm:$0xff]
    %v952 = vld [vmem:[#allocation13 + $0x40] sm:$0xff]
    %v953 = vld [vmem:[#allocation13 + $0x48] sm:$0xff]
    %v954 = vld [vmem:[#allocation13 + $0x50] sm:$0xff]
    %v955 = vld [vmem:[#allocation13 + $0x58] sm:$0xff]
    %v956 = vld [vmem:[#allocation13 + $0x60] sm:$0xff]
    %v957 = vld [vmem:[#allocation13 + $0x68] sm:$0xff]
    %v958 = vld [vmem:[#allocation13 + $0x70] sm:$0xff]
    %v959 = vld [vmem:[#allocation13 + $0x78] sm:$0xff]
    %v960 = vld [vmem:[#allocation13 + $0x80] sm:$0xff]
    %v961 = vld [vmem:[#allocation13 + $0x88] sm:$0xff]
    %v962 = vld [vmem:[#allocation13 + $0x90] sm:$0xff]
    %v963 = vld [vmem:[#allocation13 + $0x98] sm:$0xff]
    %v964 = vld [vmem:[#allocation13 + $0xa0] sm:$0xff]
    %v965 = vld [vmem:[#allocation13 + $0xa8] sm:$0xff]
    %v966 = vld [vmem:[#allocation13 + $0xb0] sm:$0xff]
    %v967 = vld [vmem:[#allocation13 + $0xb8] sm:$0xff]
    %v968 = vld [vmem:[#allocation13 + $0xc0] sm:$0xff]
    %v969 = vld [vmem:[#allocation13 + $0xc8] sm:$0xff]
    %v970 = vld [vmem:[#allocation13 + $0xd0] sm:$0xff]
    %v971 = vld [vmem:[#allocation13 + $0xd8] sm:$0xff]
    %v972 = vld [vmem:[#allocation13 + $0xe0] sm:$0xff]
    %v973 = vld [vmem:[#allocation13 + $0xe8] sm:$0xff]
    %v974 = vld [vmem:[#allocation13 + $0xf0] sm:$0xff]
    %v975 = vld [vmem:[#allocation13 + $0xf8] sm:$0xff]
    %v976 = vld [vmem:[%s8] sm:$0x1]
    %v978 = vperm.slane %v976, 0
    %980 = vmatpush.msra.mxu0 %v959
    %981 = vmatpush.msra.mxu0 %v958
    %982 = vmatpush.msra.mxu0 %v957
    %983 = vmatpush.msra.mxu0 %v956
    %984 = vmatpush.msra.mxu0 %v955
    %985 = vmatpush.msra.mxu0 %v954
    %986 = vmatpush.msra.mxu0 %v953
    %987 = vmatpush.msra.mxu0 %v952
    %988 = vmatpush.msra.mxu0 %v951
    %989 = vmatpush.msra.mxu0 %v950
    %990 = vmatpush.msra.mxu0 %v949
    %991 = vmatpush.msra.mxu0 %v948
    %992 = vmatpush.msra.mxu0 %v947
    %993 = vmatpush.msra.mxu0 %v946
    %994 = vmatpush.msra.mxu0 %v945
    %995 = vmatpush.msra.mxu0 %v944
    %996 = vmatmul.f32.gmra.mxu0 %v942
    %v997 = vpop.f32.mrf.mxu0
    %v998 = vadd.f32 %v978, %v997
    %999 = vdwg.mxu0
    %1000 = vmatpush.msra.mxu0 %v975
    %1001 = vmatpush.msra.mxu0 %v974
    %1002 = vmatpush.msra.mxu0 %v973
    %1003 = vmatpush.msra.mxu0 %v972
    %1004 = vmatpush.msra.mxu0 %v971
    %1005 = vmatpush.msra.mxu0 %v970
    %1006 = vmatpush.msra.mxu0 %v969
    %1007 = vmatpush.msra.mxu0 %v968
    %1008 = vmatpush.msra.mxu0 %v967
    %1009 = vmatpush.msra.mxu0 %v966
    %1010 = vmatpush.msra.mxu0 %v965
    %1011 = vmatpush.msra.mxu0 %v964
    %1012 = vmatpush.msra.mxu0 %v963
    %1013 = vmatpush.msra.mxu0 %v962
    %1014 = vmatpush.msra.mxu0 %v961
    %1015 = vmatpush.msra.mxu0 %v960
    %1016 = vmatmul.f32.gmra.mxu0 %v943
    %v1017 = vpop.f32.mrf.mxu0
    %v1018 = vadd.f32 %v998, %v1017
    %1019 = vdwg.mxu0
    %1020 = vst [vmem:[#allocation14] sm:$0xff] %v1018
    // Predicated region
    $region66: #{tpu_custom_call.1} parent=1 // pred_check
      _
    $region67: #{tpu_custom_call.1} parent=1 // pred_check_branch
      %1022 = sbr.rel (0) target = $region69
    $region68: #{tpu_custom_call.1} parent=1 // pred_region
      %1024 = vsyncadd [#allocation4], 0
      %s1026 = sshll.u32 [#allocation14], 4
      %s1027 = int_to_ptr.vmem [resolvable:$true] %s1026
      %s1028 = sshll.u32 %s9, 4
      %s1029 = int_to_ptr.hbm [resolvable:$true] %s1028
      %1031 = dma.vmem_to_hbm [thread:$0]  %s1027, 128, %s1029, [#allocation4]
    $region69: #{tpu_custom_call.1} parent=1 // pred_fallthru
      _
    // Predicated region
    $region70: #{tpu_custom_call.1} parent=1 // pred_check
      _
    $region71: #{tpu_custom_call.1} parent=1 // pred_check_branch
      %1033 = sbr.rel (0) target = $region73
    $region72: #{tpu_custom_call.1} parent=1 // pred_region
      %1035 = dma.done [#allocation4], 128
    $region73: #{tpu_custom_call.1} parent=1 // pred_fallthru
      _
    %1036 = vsyncpa [#allocation3], 1
    %1037 = vsyncpa [#allocation6], 1
    %1038 = vsyncpa [#allocation9], 1
    %1039 = vsyncpa [#allocation12], 1
    %1040 = vsyncpa [#allocation4], 1

</llo_original>
